<compile_context>
chip_gen: v7x
topology: tpu7x:2x2x1
jax: 0.10.0
libtpu: 0.0.40
codegen_flags: <defaults>
</compile_context>

<pallas_src>
import functools

import jax
import jax.numpy as jnp
from jax import lax
from jax.experimental import pallas as pl
from jax.experimental.pallas import tpu as pltpu


def _choose_c_tile(c, hw, in_bytes, budget_bytes=16 * 1024 * 1024):
    """Contraction tile over channels.

    Biggest tile that keeps the double-buffered x+y input tiles inside a
    conservative VMEM budget; prefer 256-multiples (v6e/v7x MXU depth), then
    128 (v5e MXU depth), then smaller sublane-legal divisors.
    """
    def fits(tc):
        return 2 * 2 * tc * hw * in_bytes <= budget_bytes  # x+y, double-buffered

    if fits(c):
        return c
    for tc in (512, 256, 128, 64, 32, 16, 8):
        if c % tc == 0 and fits(tc):
            return tc
    for tc in (256, 128, 8):
        if c % tc == 0:
            return tc
    return c


def _choose_sort_rows(nb_dirs, hw):
    """Rows per sort chunk so the live sorted value (plus roll temporaries)
    stays well inside the 64-entry vreg file across the unrolled stages."""
    cap = max(1, 8192 // hw)
    r = max(1, min(nb_dirs, cap))
    while nb_dirs % r:
        r -= 1
    return max(r, 1)


@functools.lru_cache(maxsize=None)
def _pltpu_roll_is_flipped():
    """True iff pltpu.roll(x, s, axis) behaves like jnp.roll(x, -s, axis).

    One tiny pallas_call, run once per process at setup time, so the main
    kernel's sorting-network masks stay compile-time constants.
    """
    def kernel(x_ref, o_ref):
        o_ref[...] = pltpu.roll(x_ref[...], 1, 1)

    x = lax.broadcasted_iota(jnp.int32, (8, 128), 1)
    out = pl.pallas_call(
        kernel, out_shape=jax.ShapeDtypeStruct((8, 128), jnp.int32))(x)
    first = int(jax.device_get(out)[0, 0])
    # jnp.roll(iota, +1) puts 127 at index 0; the flipped convention puts 1.
    return first == 1


def _bitonic_sort_rows(v, roll_flipped):
    """Ascending sort of every row of `v` (rows, hw) along the last axis.

    Bitonic compare-exchange network; partner fetches are single XLU lane
    rotations (pltpu.roll) and all masks are compile-time constants.
    Requires hw to be a power of two.
    """
    hw = v.shape[-1]
    lane = lax.broadcasted_iota(jnp.int32, (1, hw), 1)
    k = 2
    while k <= hw:
        j = k // 2
        while j >= 1:
            il = (lane & j) == 0            # element is lower index of its pair
            asc = (lane & k) == 0           # this k-block sorts ascending
            take_min = il == asc
            # Partner of lane i is i+j (if il) else i-j.
            shift_plus_j = j if roll_flipped else (hw - j)    # -> v[(i + j) % hw]
            shift_minus_j = (hw - j) if roll_flipped else j   # -> v[(i - j) % hw]
            ra = pltpu.roll(v, shift_plus_j, 1)
            rb = pltpu.roll(v, shift_minus_j, 1)
            partner = jnp.where(il, ra, rb)
            v = jnp.where(take_min,
                          jnp.minimum(v, partner),
                          jnp.maximum(v, partner))
            j //= 2
        k *= 2
    return v


def _wasserstein_kernel(dirs_ref, x_ref, y_ref, out_ref, proj_ref, *,
                        metric, nb_dirs, sort_rows, roll_flipped,
                        compute_dtype):
    kk = pl.program_id(0)
    nk = pl.num_programs(0)
    hw = proj_ref.shape[1]

    @pl.when(kk == 0)
    def _init():
        proj_ref[...] = jnp.zeros_like(proj_ref)

    # Feed the MXU low-precision operands (casts are no-ops for bf16 inputs),
    # accumulate in f32 directly into the resident projection slab.
    d = dirs_ref[...].astype(compute_dtype)
    x = x_ref[...].astype(compute_dtype)
    y = y_ref[...].astype(compute_dtype)
    proj_ref[pl.ds(0, nb_dirs), :] += jnp.dot(
        d, x, preferred_element_type=jnp.float32)
    proj_ref[pl.ds(nb_dirs, nb_dirs), :] += jnp.dot(
        d, y, preferred_element_type=jnp.float32)

    @pl.when(kk == nk - 1)
    def _finalize():
        n_chunks = nb_dirs // sort_rows

        def chunk_body(c, acc):
            r0 = pl.multiple_of(c * sort_rows, sort_rows)
            vx = proj_ref[pl.ds(r0, sort_rows), :]
            vy = proj_ref[pl.ds(nb_dirs + r0, sort_rows), :]
            vx = _bitonic_sort_rows(vx, roll_flipped)
            vy = _bitonic_sort_rows(vy, roll_flipped)
            diff = vx - vy
            if metric == 'l2':
                part = jnp.sum(diff * diff)
            else:  # 'l1'
                part = jnp.sum(jnp.abs(diff))
            return acc + part

        total = lax.fori_loop(0, n_chunks, chunk_body, jnp.float32(0.0))
        out_ref[0, 0] = total / jnp.float32(nb_dirs * hw)


def wasserstein_loss(x, y, directions_raw, metric='l2',
                     compute_dtype=jnp.bfloat16):
    """Pallas implementation of WassersteinLoss.forward (index_maps=None path)."""
    assert metric in ('l1', 'l2')
    assert x.shape[0] == 1 and x.shape[1:] == y.shape[1:]
    assert y.shape[0] == 1  # required by the .view(nb_dirs, h*w) in the reference
    _, c, h, w = x.shape
    hw = h * w
    assert hw & (hw - 1) == 0, "bitonic sort requires H*W to be a power of two"
    nb_dirs = directions_raw.shape[0]
    assert directions_raw.shape == (nb_dirs, c)

    # Normalize the gaussian directions in XLA (tiny nb_dirs x C array).
    d32 = directions_raw.astype(jnp.float32)
    norm = jnp.sqrt(jnp.sum(d32 * d32, axis=-1, keepdims=True))
    dirs = (d32 / norm).astype(compute_dtype)

    # Keep x / y in their native dtype (no extra HBM pass in the wrapper); the
    # kernel downcasts per tile only if needed.
    x_flat = x.reshape(c, hw)
    y_flat = y.reshape(c, hw)

    in_bytes = x_flat.dtype.itemsize
    tc = _choose_c_tile(c, hw, in_bytes)
    grid = (c // tc,)

    sort_rows = _choose_sort_rows(nb_dirs, hw)
    roll_flipped = _pltpu_roll_is_flipped()

    # VMEM budget: f32 projection slab + double-buffered input tiles + headroom.
    est = (2 * nb_dirs * hw * 4
           + 2 * 2 * tc * hw * in_bytes
           + 2 * nb_dirs * tc * dirs.dtype.itemsize)
    vmem_limit = int(min(64 * 1024 * 1024, max(4 * est, 32 * 1024 * 1024)))

    kernel = functools.partial(
        _wasserstein_kernel, metric=metric, nb_dirs=nb_dirs,
        sort_rows=sort_rows, roll_flipped=roll_flipped,
        compute_dtype=compute_dtype)

    out = pl.pallas_call(
        kernel,
        out_shape=jax.ShapeDtypeStruct((1, 1), jnp.float32),
        grid_spec=pltpu.PrefetchScalarGridSpec(
            num_scalar_prefetch=0,
            grid=grid,
            in_specs=[
                pl.BlockSpec((nb_dirs, tc), lambda kk: (0, kk)),
                pl.BlockSpec((tc, hw), lambda kk: (kk, 0)),
                pl.BlockSpec((tc, hw), lambda kk: (kk, 0)),
            ],
            out_specs=pl.BlockSpec((1, 1), lambda kk: (0, 0),
                                   memory_space=pltpu.MemorySpace.SMEM),
            scratch_shapes=[
                pltpu.VMEM((2 * nb_dirs, hw), jnp.float32),  # x rows | y rows
            ],
        ),
        compiler_params=pltpu.CompilerParams(
            dimension_semantics=("arbitrary",),
            vmem_limit_bytes=vmem_limit,
        ),
    )(dirs, x_flat, y_flat)
    return out[0, 0]


# TODO(synk): the `index_maps` gather branch of forward() (data-dependent
# column gathers per map) is not implemented; only the default index_maps=None
# path is.


def _reference_loss(x, y, directions_raw, metric='l2'):
    """Pure-JAX f32 reference matching the PyTorch module."""
    _, c, h, w = x.shape
    hw = h * w
    d = directions_raw / jnp.sqrt(
        jnp.sum(directions_raw ** 2, axis=-1, keepdims=True))
    proj_x = jnp.sort(d @ x.reshape(c, hw).astype(jnp.float32), axis=-1)
    proj_y = jnp.sort(d @ y.reshape(c, hw).astype(jnp.float32), axis=-1)
    diff = proj_x - proj_y
    if metric == 'l2':
        return jnp.mean(diff * diff)
    return jnp.mean(jnp.abs(diff))


if __name__ == "__main__":
    key = jax.random.PRNGKey(0)
    kx, ky, kd = jax.random.split(key, 3)

    # Shapes consistent with the module: batch=1 (asserted by forward), C=4, 16x16.
    C, H, W = 4, 16, 16
    nb_dirs = C  # module default: nb_dirs=0 -> n_features

    x = jax.random.normal(kx, (1, C, H, W), dtype=jnp.float32)
    y = jax.random.normal(ky, (1, C, H, W), dtype=jnp.float32)
    # Deterministic "random_dir" raw gaussians (normalized in the wrapper).
    directions_raw = jax.random.normal(kd, (nb_dirs, C), dtype=jnp.float32)

    for metric in ('l2', 'l1'):
        loss = wasserstein_loss(x, y, directions_raw, metric=metric)
        loss = jax.block_until_ready(loss)
        ref = _reference_loss(x, y, directions_raw, metric=metric)
        # bf16 MXU operands (f32 accumulation) -> small drift vs the f32 ref.
        if not jnp.allclose(loss, ref, rtol=3e-2, atol=1e-3):
            raise AssertionError(f"{metric} mismatch: pallas={loss} ref={ref}")

    print("KERNEL_OK")
</pallas_src>

<mosaic_0001>
module attributes {stable_mosaic.version = 11 : i64} {
  func.func @kernel(%arg0: memref<8x128xi32, #tpu.memory_space<vmem>>, %arg1: memref<8x128xi32, #tpu.memory_space<vmem>>) attributes {dimension_semantics = [], scalar_prefetch = 0 : i64, scratch_operands = 0 : i64, tpu.core_type = #tpu.core_type<tc>} {
    %c0 = arith.constant 0 : index
    %c0_0 = arith.constant 0 : index
    %0 = vector.load %arg0[%c0, %c0_0] : memref<8x128xi32, #tpu.memory_space<vmem>>, vector<8x128xi32>
    %c1_i32 = arith.constant 1 : i32
    %1 = tpu.dynamic_rotate %0 by %c1_i32 dim 1 : vector<8x128xi32>, i32 -> vector<8x128xi32>
    %c0_1 = arith.constant 0 : index
    %c0_2 = arith.constant 0 : index
    %2 = vector.load %arg1[%c0_1, %c0_2] : memref<8x128xi32, #tpu.memory_space<vmem>>, vector<8x128xi32>
    tpu.vector_store %arg1[%c0_1, %c0_2], %1 {strides = array<i32>} : memref<8x128xi32, #tpu.memory_space<vmem>>, vector<8x128xi32>,
    return
  }
}

</mosaic_0001>

<llo_original>
// kernel: tpu_custom_call.1
$region0: #{tpu_custom_call.1}
  #allocation0 [shape = 'u32[]', space=smem, size = 0x4, offset = 0x4, fixed_abs, tag = 'smem constant byte address 0x4 - core index']
  #allocation1 [shape = 'u32[144,128]{1,0:T(1,128)}', space=vmem, size = 0x12000, scoped, tag = 'internal scratch']
  %s0 = inlined_call_operand.hbm [shape: s32[8,128], index: 0, kind: input, shape index: {}]
  %s1 = inlined_call_operand.hbm [shape: s32[8,128], index: 1, kind: output, shape index: {}]
  %s2 = sld [smem:[#allocation0]]
  $region18: #{tpu_custom_call.1} parent=0
    _
  %s4 = ssub.s32 1, %s2
  %s5 = scalar_select 0, %s4, %s2
  $region1: #{tpu_custom_call.1} parent=0
    #allocation2 [shape = 'u8[4096]{0}', space=vmem, size = 0x1000, scoped, tag = 'input window, operand 0, single buffered']
    #allocation3 [shape = 's32[1]{0}', space=sflag, size = 0x4, scoped, tag = 'scoped memory for tpu_custom_call.1']
    #allocation4 [shape = 's32[1]{0}', space=sflag, size = 0x4, scoped, tag = 'scoped memory for tpu_custom_call.1']
    #allocation5 [shape = 'u8[4096]{0}', space=vmem, size = 0x1000, scoped, tag = 'output window, operand 0, single buffered']
    %6 = vsyncpa [#allocation3], 0
    %7 = vsyncpa [#allocation4], 0
    // Predicated region
    $region2: #{tpu_custom_call.1} parent=1 // pred_check
      _
    $region3: #{tpu_custom_call.1} parent=1 // pred_check_branch
      %9 = sbr.rel (0) target = $region5
    $region4: #{tpu_custom_call.1} parent=1 // pred_region
      %s11 = ssub.s32 128, 128
      %12 = vsyncadd [#allocation3], %s11
      %s14 = sshll.u32 [#allocation2], 4
      %s15 = int_to_ptr.vmem [resolvable:$true] %s14
      %17 = dma.hbm_to_vmem [thread:$0]  %s0, 128, %s15, [#allocation3]
    $region5: #{tpu_custom_call.1} parent=1 // pred_fallthru
      _
    // Predicated region
    $region6: #{tpu_custom_call.1} parent=1 // pred_check
      _
    $region7: #{tpu_custom_call.1} parent=1 // pred_check_branch
      %19 = sbr.rel (0) target = $region9
    $region8: #{tpu_custom_call.1} parent=1 // pred_region
      %20 = dma.done [#allocation3], 128
    $region9: #{tpu_custom_call.1} parent=1 // pred_fallthru
      _
    %v21 = vld [vmem:[#allocation2] sm:$0xff]
    %22 = vrot.lane.b32.xlu0 %v21, 1
    %v23 = vpop.permute.xlu0 %22
    %24 = vst [vmem:[#allocation5] sm:$0xff] %v23
    // Predicated region
    $region10: #{tpu_custom_call.1} parent=1 // pred_check
      _
    $region11: #{tpu_custom_call.1} parent=1 // pred_check_branch
      %26 = sbr.rel (0) target = $region13
    $region12: #{tpu_custom_call.1} parent=1 // pred_region
      %s28 = ssub.s32 128, 128
      %29 = vsyncadd [#allocation4], %s28
      %s31 = sshll.u32 [#allocation5], 4
      %s32 = int_to_ptr.vmem [resolvable:$true] %s31
      %34 = dma.vmem_to_hbm [thread:$0]  %s32, 128, %s1, [#allocation4]
    $region13: #{tpu_custom_call.1} parent=1 // pred_fallthru
      _
    // Predicated region
    $region14: #{tpu_custom_call.1} parent=1 // pred_check
      _
    $region15: #{tpu_custom_call.1} parent=1 // pred_check_branch
      %36 = sbr.rel (0) target = $region17
    $region16: #{tpu_custom_call.1} parent=1 // pred_region
      %37 = dma.done [#allocation4], 128
    $region17: #{tpu_custom_call.1} parent=1 // pred_fallthru
      _
    %38 = vsyncpa [#allocation3], 1
    %39 = vsyncpa [#allocation4], 1

</llo_original>
